<compile_context>
chip_gen: v7x
topology: tpu7x:2x2x1
jax: 0.10.0
libtpu: 0.0.40
codegen_flags: <defaults>
</compile_context>

<pallas_src>
import functools

import jax
import jax.numpy as jnp
from jax.experimental import pallas as pl
from jax.experimental.pallas import tpu as pltpu

_LANE = 128
_MIN_SPLIT_ROWS = 512          # never split into blocks smaller than this
_TARGET_BLOCK_BYTES = 4 << 20  # ~4 MiB block; 2x(in+out) footprint = 16 MiB
_MAX_INT_EXP = 64              # exp-by-squaring cutoff


def _int_pow(x, e):
    """Exponentiation-by-squaring multiply chain, unrolled at trace time."""
    result = None
    base = x
    while e > 0:
        if e & 1:
            result = base if result is None else result * base
        e >>= 1
        if e:
            base = base * base
    return result


def _pow_math(x, p, out_dtype, compute_dtype):
    """Shared math for the kernel body and the (tiny) unaligned jnp tail."""
    pf = float(p)
    xc = x.astype(compute_dtype)
    if pf == 0.0:
        # torch.pow(x, 0) == 1 everywhere (wrapper early-outs before this).
        return jnp.ones_like(x).astype(out_dtype)
    if pf.is_integer() and abs(int(pf)) <= _MAX_INT_EXP:
        y = _int_pow(xc, abs(int(pf)))              # VALU multiply chain
        if pf < 0:
            y = 1.0 / y
        return y.astype(out_dtype)
    if (2.0 * pf).is_integer() and abs(pf) <= _MAX_INT_EXP + 0.5:
        # Half-integer exponent: x**(m+0.5) = x**m * sqrt(x) -> one EUP op
        # instead of the exp(p*log(x)) pair from the generic pow lowering.
        m = int(abs(pf))
        y = jnp.sqrt(xc)
        if m > 0:
            y = y * _int_pow(xc, m)
        if pf < 0:
            y = 1.0 / y
        return y.astype(out_dtype)
    # Generic (transcendental) pow; matches torch.pow semantics
    # (NaN for negative base with non-integer exponent).
    return (xc ** pf).astype(out_dtype)


def _power_kernel(x_ref, o_ref, *, p, compute_dtype):
    o_ref[...] = _pow_math(x_ref[...], p, o_ref.dtype, compute_dtype)


def _chain_muls(e):
    e = abs(int(e))
    if e <= 1:
        return 1
    return (e.bit_length() - 1) + (bin(e).count("1") - 1)


def _cost_estimate(p, n, itemsize):
    pf = float(p)
    if pf.is_integer() and abs(int(pf)) <= _MAX_INT_EXP:
        flops, trans = (_chain_muls(pf) + (1 if pf < 0 else 0)) * n, 0
    elif (2.0 * pf).is_integer() and abs(pf) <= _MAX_INT_EXP + 0.5:
        flops, trans = (_chain_muls(int(abs(pf))) + 2) * n, n            # sqrt
    else:
        flops, trans = 2 * n, 2 * n                                      # log+exp
    return pl.CostEstimate(flops=flops, transcendentals=trans,
                           bytes_accessed=2 * n * itemsize)


def power_activation(x, p, *, block_bytes=_TARGET_BLOCK_BYTES):
    """Elementwise x ** p via a Pallas TPU kernel (any shape)."""
    orig_shape = x.shape
    dtype = x.dtype
    n = x.size
    pf = float(p)

    # Wrapper early-outs: skip the HBM round-trip entirely.
    if n == 0 or pf == 1.0:
        return x
    if pf == 0.0:
        return jnp.ones(orig_shape, dtype)

    compute_dtype = jnp.float32 if jnp.issubdtype(dtype, jnp.floating) else dtype
    itemsize = jnp.dtype(dtype).itemsize
    # Native sublane multiple: sub-32-bit dtypes pack along sublanes.
    sub = {1: 32, 2: 16}.get(itemsize, 8)

    flat = x.reshape(-1)
    rows = n // _LANE
    aligned = rows * _LANE

    if rows == 0:
        # Fewer than one lane row: not worth a kernel launch.
        return _pow_math(flat, p, dtype, compute_dtype).reshape(orig_shape)

    slab = (flat if aligned == n else flat[:aligned]).reshape(rows, _LANE)

    # Tile-row selection: target ~block_bytes per block; split into >= 4
    # "parallel" steps only when each block keeps >= _MIN_SPLIT_ROWS rows.
    cap = max(sub, (block_bytes // (_LANE * itemsize)) // sub * sub)
    if rows >= 4 * _MIN_SPLIT_ROWS:
        tr = min(cap, pl.cdiv(pl.cdiv(rows, 4), sub) * sub)
    else:
        tr = rows              # single block == full array dims (always legal)
    grid_steps = pl.cdiv(rows, tr)

    out = pl.pallas_call(
        functools.partial(_power_kernel, p=p, compute_dtype=compute_dtype),
        out_shape=jax.ShapeDtypeStruct((rows, _LANE), dtype),
        grid=(grid_steps,),
        in_specs=[pl.BlockSpec((tr, _LANE), lambda i: (i, 0))],
        out_specs=pl.BlockSpec((tr, _LANE), lambda i: (i, 0)),
        compiler_params=pltpu.CompilerParams(
            dimension_semantics=("parallel",),
            vmem_limit_bytes=32 * 1024 * 1024,
        ),
        cost_estimate=_cost_estimate(p, aligned, itemsize),
    )(slab)

    out_flat = out.reshape(-1)
    if aligned != n:
        # < 128 leftover elements: plain jnp tail instead of padding the whole
        # tensor (saves two full HBM passes on a bandwidth-bound kernel).
        tail = _pow_math(flat[aligned:], p, dtype, compute_dtype)
        out_flat = jnp.concatenate([out_flat, tail])
    return out_flat.reshape(orig_shape)


if __name__ == "__main__":
    key = jax.random.PRNGKey(0)
    x = jax.random.normal(key, (2, 4, 16, 16), dtype=jnp.float32)

    # Integer power (VALU multiply-chain path), as in power_activation(p=3).
    p = 3.0
    y = jax.block_until_ready(power_activation(x, p))
    y_ref = x ** p
    assert y.shape == x.shape and y.dtype == x.dtype
    assert jnp.allclose(y, y_ref, atol=1e-5, rtol=1e-5)

    # Half-integer power (sqrt-decomposition path) on positive inputs.
    xp = jnp.abs(x) + 0.1
    p2 = 2.5
    y2 = jax.block_until_ready(power_activation(xp, p2))
    assert jnp.allclose(y2, xp ** p2, atol=1e-4, rtol=1e-4)

    # Lane-unaligned size exercises the prefix-kernel + jnp-tail path.
    xu = jax.random.normal(jax.random.PRNGKey(1), (3, 7, 13), dtype=jnp.float32)
    y3 = jax.block_until_ready(power_activation(xu, 3.0))
    assert jnp.allclose(y3, xu ** 3.0, atol=1e-5, rtol=1e-5)

    # Trivial exponents hit the wrapper early-outs (no kernel launch).
    assert jnp.allclose(power_activation(x, 1.0), x)
    assert jnp.allclose(power_activation(x, 0.0), jnp.ones_like(x))

    print("KERNEL_OK")
</pallas_src>

<mosaic_0001>
module attributes {stable_mosaic.version = 11 : i64} {
  func.func @_power_kernel(%arg0: i32, %arg1: memref<16x128xf32, #tpu.memory_space<vmem>>, %arg2: memref<16x128xf32, #tpu.memory_space<vmem>>) attributes {dimension_semantics = [#tpu.dimension_semantics<parallel>], iteration_bounds = array<i64: 1>, scalar_prefetch = 0 : i64, scratch_operands = 0 : i64, tpu.core_type = #tpu.core_type<tc>, window_params = [{transform_indices = @transform_0, window_bounds = array<i64: 16, 128>}, {transform_indices = @transform_1, window_bounds = array<i64: 16, 128>}]} {
    %c0 = arith.constant 0 : index
    %c0_0 = arith.constant 0 : index
    %0 = vector.load %arg1[%c0, %c0_0] : memref<16x128xf32, #tpu.memory_space<vmem>>, vector<16x128xf32>
    %1 = arith.mulf %0, %0 : vector<16x128xf32>
    %2 = arith.mulf %0, %1 : vector<16x128xf32>
    %c0_1 = arith.constant 0 : index
    %c0_2 = arith.constant 0 : index
    %3 = vector.load %arg2[%c0_1, %c0_2] : memref<16x128xf32, #tpu.memory_space<vmem>>, vector<16x128xf32>
    tpu.vector_store %arg2[%c0_1, %c0_2], %2 {strides = array<i32>} : memref<16x128xf32, #tpu.memory_space<vmem>>, vector<16x128xf32>,
    return
  }
  func.func @transform_0(%arg0: i32) -> (i32, i32) {
    %c0_i32 = arith.constant 0 : i32
    %c0_i32_0 = arith.constant 0 : i32
    return %arg0, %c0_i32 : i32, i32
  }
  func.func @transform_1(%arg0: i32) -> (i32, i32) {
    %c0_i32 = arith.constant 0 : i32
    %c0_i32_0 = arith.constant 0 : i32
    return %arg0, %c0_i32 : i32, i32
  }
}

</mosaic_0001>

<llo_original>
// kernel: tpu_custom_call.1
$region0: #{tpu_custom_call.1}
  #allocation0 [shape = 'u32[]', space=smem, size = 0x4, offset = 0x4, fixed_abs, tag = 'smem constant byte address 0x4 - core index']
  #allocation1 [shape = 'u32[144,128]{1,0:T(1,128)}', space=vmem, size = 0x12000, scoped, tag = 'internal scratch']
  %s0 = inlined_call_operand.hbm [shape: f32[16,128], index: 0, kind: input, shape index: {}]
  %s1 = inlined_call_operand.hbm [shape: f32[16,128], index: 1, kind: output, shape index: {}]
  %s2 = sld [smem:[#allocation0]]
  $region18: #{tpu_custom_call.1} parent=0
    _
  %s4 = ssub.s32 1, %s2
  %s5 = scalar_select 0, %s4, %s2
  $region1: #{tpu_custom_call.1} parent=0
    #allocation2 [shape = 'u8[8192]{0}', space=vmem, size = 0x2000, scoped, tag = 'input window, operand 0, single buffered']
    #allocation3 [shape = 's32[1]{0}', space=sflag, size = 0x4, scoped, tag = 'scoped memory for tpu_custom_call.1']
    #allocation4 [shape = 's32[1]{0}', space=sflag, size = 0x4, scoped, tag = 'scoped memory for tpu_custom_call.1']
    #allocation5 [shape = 'u8[8192]{0}', space=vmem, size = 0x2000, scoped, tag = 'output window, operand 0, single buffered']
    %6 = vsyncpa [#allocation3], 0
    %7 = vsyncpa [#allocation4], 0
    // Predicated region
    $region2: #{tpu_custom_call.1} parent=1 // pred_check
      _
    $region3: #{tpu_custom_call.1} parent=1 // pred_check_branch
      %9 = sbr.rel (0) target = $region5
    $region4: #{tpu_custom_call.1} parent=1 // pred_region
      %s11 = ssub.s32 256, 256
      %12 = vsyncadd [#allocation3], %s11
      %s13 = sshll.u32 [#allocation2], 4
      %s14 = int_to_ptr.vmem [resolvable:$true] %s13
      %19 = dma.hbm_to_vmem [thread:$0]  %s0, 256, %s14, [#allocation3], 128, 128, 8
    $region5: #{tpu_custom_call.1} parent=1 // pred_fallthru
      _
    // Predicated region
    $region6: #{tpu_custom_call.1} parent=1 // pred_check
      _
    $region7: #{tpu_custom_call.1} parent=1 // pred_check_branch
      %21 = sbr.rel (0) target = $region9
    $region8: #{tpu_custom_call.1} parent=1 // pred_region
      %22 = dma.done [#allocation3], 256
    $region9: #{tpu_custom_call.1} parent=1 // pred_fallthru
      _
    %v23 = vld [vmem:[#allocation2] sm:$0xff]
    %v24 = vld [vmem:[#allocation2 + $0x8] sm:$0xff]
    %v25 = vmul.f32 %v23, %v23
    %v26 = vmul.f32 %v24, %v24
    %v27 = vmul.f32 %v23, %v25
    %v28 = vmul.f32 %v24, %v26
    %29 = vst [vmem:[#allocation5] sm:$0xff] %v27
    %30 = vst [vmem:[#allocation5 + $0x8] sm:$0xff] %v28
    // Predicated region
    $region10: #{tpu_custom_call.1} parent=1 // pred_check
      _
    $region11: #{tpu_custom_call.1} parent=1 // pred_check_branch
      %32 = sbr.rel (0) target = $region13
    $region12: #{tpu_custom_call.1} parent=1 // pred_region
      %s34 = ssub.s32 256, 256
      %35 = vsyncadd [#allocation4], %s34
      %s36 = sshll.u32 [#allocation5], 4
      %s37 = int_to_ptr.vmem [resolvable:$true] %s36
      %42 = dma.vmem_to_hbm [thread:$0]  %s37, 256, %s1, [#allocation4], 128, 128, 8
    $region13: #{tpu_custom_call.1} parent=1 // pred_fallthru
      _
    // Predicated region
    $region14: #{tpu_custom_call.1} parent=1 // pred_check
      _
    $region15: #{tpu_custom_call.1} parent=1 // pred_check_branch
      %44 = sbr.rel (0) target = $region17
    $region16: #{tpu_custom_call.1} parent=1 // pred_region
      %45 = dma.done [#allocation4], 256
    $region17: #{tpu_custom_call.1} parent=1 // pred_fallthru
      _
    %46 = vsyncpa [#allocation3], 1
    %47 = vsyncpa [#allocation4], 1

</llo_original>
